<compile_context>
chip_gen: v7x
topology: tpu7x:2x2x1
jax: 0.10.0
libtpu: 0.0.40
codegen_flags: <defaults>
</compile_context>

<pallas_src>
import functools

import jax
import jax.numpy as jnp
from jax.experimental import pallas as pl
from jax.experimental.pallas import tpu as pltpu


def _round_up(x, m):
    return ((x + m - 1) // m) * m


def _rmsnorm_kernel(x_ref, w_ref, o_ref, *, eps):
    x = x_ref[...]                          # (tm, H) in input dtype
    input_dtype = x.dtype
    xf = x.astype(jnp.float32)

    variance = jnp.mean(xf * xf, axis=-1, keepdims=True)          # (tm, 1) f32
    normed = xf * jax.lax.rsqrt(variance + eps)                    # (tm, H) f32

    # Matches PyTorch: weight * hidden_states.to(input_dtype); JAX's promotion
    # of (weight_dtype, input_dtype) mirrors torch's. For f32 inputs the
    # astype is a no-op, so no extra VPU cast passes are emitted.
    y = w_ref[...] * normed.astype(input_dtype)
    o_ref[...] = y.astype(o_ref.dtype)


def _pick_block_rows(n_tokens, h, in_itemsize, out_itemsize):
    """Device-VMEM-aware row tile (tokens per grid step)."""
    try:
        info = pltpu.get_tpu_info()
        vmem_bytes = int(getattr(info, "vmem_capacity_bytes", 64 * 1024 * 1024))
    except Exception:
        # Conservative (v7x-sized) fallback.
        # TODO(synk): make sizing device-aware under AOT/CPU compilation.
        vmem_bytes = 64 * 1024 * 1024

    # Sublane granularity for the packed input dtype: f32 -> 8, bf16 -> 16,
    # int8/fp8 -> 32 rows.
    sub = 32 if in_itemsize == 1 else (16 if in_itemsize == 2 else 8)

    hp = _round_up(h, 128)  # lane-padded VMEM footprint of one row

    # Per-row VMEM footprint: double-buffered input + output tiles plus the
    # f32 intermediates (xf and the normalized copy) that live alongside the
    # tile.  Keep total data under ~half of VMEM so spills / pipeline-fit
    # failures can't occur even on v7x's 64 MiB.
    bytes_per_row = hp * (2 * in_itemsize + 2 * out_itemsize + 8)
    rows = (vmem_bytes // 2) // max(bytes_per_row, 1)

    # Bytes-based tile target: keep the *input* tile around <= 8 MiB (measured
    # roofline: ~85%+ of HBM BW at 4+ MiB tiles, no gain beyond).
    in_row_bytes = hp * in_itemsize
    rows = min(rows, max(sub, (8 * 1024 * 1024) // max(in_row_bytes, 1)))

    # Keep >= ~8 grid steps when there is enough work, so the "parallel" row
    # axis feeds both TensorCores on v7x without load imbalance.
    if n_tokens >= 8 * sub:
        rows = min(rows, _round_up(pl.cdiv(n_tokens, 8), sub))

    # Don't over-tile tiny inputs.
    rows = min(rows, _round_up(max(n_tokens, 1), sub))
    rows = max(sub, (rows // sub) * sub)

    # TODO(synk): for extremely large H (e.g. >=64K f32) even `sub` rows may
    # exceed the VMEM budget; add a hidden-dim ("arbitrary") column-tiling
    # fallback with a (tm,1) sum-of-squares accumulator + finalize pass.
    return int(rows), vmem_bytes


def rmsnorm(x, weight, eps=1e-6, block_rows=None, out_dtype=None):
    """x: (..., H), weight: (H,).

    out_dtype defaults to promote(x.dtype, weight.dtype) (faithful to the
    PyTorch module); pass out_dtype=x.dtype to cut output HBM traffic for the
    bf16-activation / f32-weight case.
    """
    orig_shape = x.shape
    H = orig_shape[-1]
    x2 = x.reshape(-1, H)
    N = x2.shape[0]
    if out_dtype is None:
        out_dtype = jnp.promote_types(x.dtype, weight.dtype)

    in_itemsize = jnp.dtype(x.dtype).itemsize
    out_itemsize = jnp.dtype(out_dtype).itemsize
    sub = 32 if in_itemsize == 1 else (16 if in_itemsize == 2 else 8)

    auto_rows, vmem_bytes = _pick_block_rows(N, H, in_itemsize, out_itemsize)
    if block_rows is None:
        block_rows = auto_rows
    else:
        block_rows = max(sub, _round_up(int(block_rows), sub))

    w2 = weight.reshape(1, H)

    # Ragged last block handled by Pallas (OOB reads feed rows whose writes
    # are dropped; rows are independent, so valid rows are unaffected).
    grid = (pl.cdiv(N, block_rows),)

    # Raise the scoped-VMEM limit (defaults: 16 MiB v5e / 32 MiB v6e+v7x)
    # while staying under physical capacity.
    vmem_limit = min((vmem_bytes * 3) // 4, 100 * 1024 * 1024)

    kernel = functools.partial(_rmsnorm_kernel, eps=float(eps))

    out = pl.pallas_call(
        kernel,
        out_shape=jax.ShapeDtypeStruct((N, H), out_dtype),
        grid_spec=pltpu.PrefetchScalarGridSpec(
            num_scalar_prefetch=0,
            grid=grid,
            in_specs=[
                # Full-extent last dim (== H) satisfies the (8,128) rule even
                # for non-128-multiple H, with no HBM-side padding pass.
                pl.BlockSpec((block_rows, H), lambda i: (i, 0)),
                # Constant index_map -> weight row stays resident in VMEM.
                pl.BlockSpec((1, H), lambda i: (0, 0)),
            ],
            out_specs=pl.BlockSpec((block_rows, H), lambda i: (i, 0)),
        ),
        compiler_params=pltpu.CompilerParams(
            dimension_semantics=("parallel",),   # shards rows across v7x's 2 TCs
            vmem_limit_bytes=int(vmem_limit),
        ),
    )(x2, w2)

    return out.reshape(orig_shape)


def rmsnorm_ref(x, weight, eps=1e-6):
    input_dtype = x.dtype
    xf = x.astype(jnp.float32)
    variance = jnp.mean(xf * xf, axis=-1, keepdims=True)
    normed = xf * jax.lax.rsqrt(variance + eps)
    return weight * normed.astype(input_dtype)


if __name__ == "__main__":
    key = jax.random.PRNGKey(0)
    B, S, H = 2, 8, 32
    x = jax.random.normal(key, (B, S, H), dtype=jnp.float32)
    # Matches nn.Parameter(torch.ones(hidden_size)).
    weight = jnp.ones((H,), dtype=jnp.float32)

    out = rmsnorm(x, weight, eps=1e-6)
    out = jax.block_until_ready(out)

    ref = rmsnorm_ref(x, weight, eps=1e-6)
    assert out.shape == x.shape
    assert out.dtype == jnp.promote_types(x.dtype, weight.dtype)
    assert jnp.allclose(out, ref, atol=1e-5, rtol=1e-5), "mismatch vs reference"
    print("KERNEL_OK")
</pallas_src>

<mosaic_0001>
module attributes {stable_mosaic.version = 11 : i64} {
  func.func @_rmsnorm_kernel(%arg0: i32, %arg1: memref<16x32xf32, #tpu.memory_space<vmem>>, %arg2: memref<1x32xf32, #tpu.memory_space<vmem>>, %arg3: memref<16x32xf32, #tpu.memory_space<vmem>>) attributes {dimension_semantics = [#tpu.dimension_semantics<parallel>], iteration_bounds = array<i64: 1>, scalar_prefetch = 0 : i64, scratch_operands = 0 : i64, tpu.core_type = #tpu.core_type<tc>, window_params = [{transform_indices = @transform_0, window_bounds = array<i64: 16, 32>}, {pipeline_mode = #tpu.pipeline_mode<synchronous>, transform_indices = @transform_1, window_bounds = array<i64: 1, 32>}, {transform_indices = @transform_2, window_bounds = array<i64: 16, 32>}]} {
    %c0 = arith.constant 0 : index
    %c0_0 = arith.constant 0 : index
    %0 = vector.load %arg1[%c0, %c0_0] : memref<16x32xf32, #tpu.memory_space<vmem>>, vector<16x32xf32>
    %1 = arith.mulf %0, %0 : vector<16x32xf32>
    %cst = arith.constant dense<0.000000e+00> : vector<16xf32>
    %2 = vector.multi_reduction <add>, %1, %cst [1] : vector<16x32xf32> to vector<16xf32>
    %3 = vector.shape_cast %2 : vector<16xf32> to vector<16x1xf32>
    %cst_1 = arith.constant 3.200000e+01 : f32
    %4 = vector.broadcast %cst_1 : f32 to vector<16x1xf32>
    %5 = arith.divf %3, %4 : vector<16x1xf32>
    %cst_2 = arith.constant 9.99999997E-7 : f32
    %6 = vector.broadcast %cst_2 : f32 to vector<16x1xf32>
    %7 = arith.addf %5, %6 : vector<16x1xf32>
    %8 = math.rsqrt %7 : vector<16x1xf32>
    %9 = vector.broadcast %8 : vector<16x1xf32> to vector<16x32xf32>
    %10 = arith.mulf %0, %9 : vector<16x32xf32>
    %c0_3 = arith.constant 0 : index
    %c0_4 = arith.constant 0 : index
    %11 = vector.load %arg2[%c0_3, %c0_4] : memref<1x32xf32, #tpu.memory_space<vmem>>, vector<1x32xf32>
    %12 = vector.broadcast %11 : vector<1x32xf32> to vector<16x32xf32>
    %13 = arith.mulf %12, %10 : vector<16x32xf32>
    %c0_5 = arith.constant 0 : index
    %c0_6 = arith.constant 0 : index
    %14 = vector.load %arg3[%c0_5, %c0_6] : memref<16x32xf32, #tpu.memory_space<vmem>>, vector<16x32xf32>
    tpu.vector_store %arg3[%c0_5, %c0_6], %13 {strides = array<i32>} : memref<16x32xf32, #tpu.memory_space<vmem>>, vector<16x32xf32>,
    return
  }
  func.func @transform_0(%arg0: i32) -> (i32, i32) {
    %c0_i32 = arith.constant 0 : i32
    %c0_i32_0 = arith.constant 0 : i32
    return %arg0, %c0_i32 : i32, i32
  }
  func.func @transform_1(%arg0: i32) -> (i32, i32) {
    %c0_i32 = arith.constant 0 : i32
    %c0_i32_0 = arith.constant 0 : i32
    %c0_i32_1 = arith.constant 0 : i32
    return %c0_i32, %c0_i32_0 : i32, i32
  }
  func.func @transform_2(%arg0: i32) -> (i32, i32) {
    %c0_i32 = arith.constant 0 : i32
    %c0_i32_0 = arith.constant 0 : i32
    return %arg0, %c0_i32 : i32, i32
  }
}

</mosaic_0001>

<llo_original>
// kernel: tpu_custom_call.1
$region0: #{tpu_custom_call.1}
  #allocation0 [shape = 'u32[]', space=smem, size = 0x4, offset = 0x4, fixed_abs, tag = 'smem constant byte address 0x4 - core index']
  #allocation1 [shape = 'u32[144,128]{1,0:T(1,128)}', space=vmem, size = 0x12000, scoped, tag = 'internal scratch']
  %s0 = inlined_call_operand.hbm [shape: f32[16,32], index: 0, kind: input, shape index: {}]
  %s1 = inlined_call_operand.vmem [shape: f32[1,32], index: 1, kind: input, shape index: {}]
  %s2 = inlined_call_operand.hbm [shape: f32[16,32], index: 2, kind: output, shape index: {}]
  %s3 = sld [smem:[#allocation0]]
  $region22: #{tpu_custom_call.1} parent=0
    _
  %s5 = ssub.s32 1, %s3
  %s6 = scalar_select 0, %s5, %s3
  $region1: #{tpu_custom_call.1} parent=0
    #allocation2 [shape = 'u8[8192]{0}', space=vmem, size = 0x2000, scoped, tag = 'input window, operand 0, single buffered']
    #allocation3 [shape = 's32[1]{0}', space=sflag, size = 0x4, scoped, tag = 'scoped memory for tpu_custom_call.1']
    #allocation4 [shape = 's32[1]{0}', space=sflag, size = 0x4, scoped, tag = 'scoped memory for tpu_custom_call.1']
    #allocation5 [shape = 'u8[8192]{0}', space=vmem, size = 0x2000, scoped, tag = 'output window, operand 0, single buffered']
    %7 = vsyncpa [#allocation3], 0
    %8 = vsyncpa [#allocation4], 0
    // Predicated region
    $region2: #{tpu_custom_call.1} parent=1 // pred_check
      _
    $region3: #{tpu_custom_call.1} parent=1 // pred_check_branch
      %10 = sbr.rel (0) target = $region5
    $region4: #{tpu_custom_call.1} parent=1 // pred_region
      %s12 = ssub.s32 256, 256
      %13 = vsyncadd [#allocation3], %s12
      %s14 = sshll.u32 [#allocation2], 4
      %s15 = int_to_ptr.vmem [resolvable:$true] %s14
      %20 = dma.hbm_to_vmem [thread:$0]  %s0, 256, %s15, [#allocation3], 128, 128, 8
    $region5: #{tpu_custom_call.1} parent=1 // pred_fallthru
      _
    // Predicated region
    $region6: #{tpu_custom_call.1} parent=1 // pred_check
      _
    $region7: #{tpu_custom_call.1} parent=1 // pred_check_branch
      %22 = sbr.rel (0) target = $region9
    $region8: #{tpu_custom_call.1} parent=1 // pred_region
      _
    $region9: #{tpu_custom_call.1} parent=1 // pred_fallthru
      _
    // Predicated region
    $region10: #{tpu_custom_call.1} parent=1 // pred_check
      _
    $region11: #{tpu_custom_call.1} parent=1 // pred_check_branch
      %24 = sbr.rel (0) target = $region13
    $region12: #{tpu_custom_call.1} parent=1 // pred_region
      %25 = dma.done [#allocation3], 256
    $region13: #{tpu_custom_call.1} parent=1 // pred_fallthru
      _
    %v26 = vld [vmem:[#allocation2] sm:$0xff]
    %v27 = vld [vmem:[#allocation2 + $0x8] sm:$0xff]
    %v28 = vmul.f32 %v26, %v26
    %v29 = vmul.f32 %v27, %v27
    %vm30 = vcmask 261120
    %v31 = vsel %vm30, %v28, 0.0
    %32 = vadd.xlane.f32.xlu0 %v31
    %v33 = vpop.xlane.xlu0 %32
    %v34 = vsel %vm30, %v29, 0.0
    %35 = vadd.xlane.f32.xlu0 %v34
    %v36 = vpop.xlane.xlu0 %35
    %v37 = vrcp.pop 32.0
    %v38 = vmul.f32 %v33, %v37
    %v39 = vmul.f32 %v36, %v37
    %v40 = vadd.f32 %v38, 1e-06
    %v41 = vadd.f32 %v39, 1e-06
    %v42 = vrsqrt.pop %v40
    %v43 = vrsqrt.pop %v41
    %v44 = vmul.f32 %v26, %v42
    %v45 = vmul.f32 %v27, %v43
    %v46 = vld [vmem:[%s1] sm:$0x1]
    %v48 = vlaneseq
    %v49 = vshrl.u32 %v48, 7
    %v50 = vsub.s32 0, %v49
    %v51 = vrot.slane %v46, %v50
    %v53 = vmul.f32 %v51, %v44
    %v54 = vmul.f32 %v51, %v45
    %55 = vst.msk [vmem:[#allocation5] sm:$0xff] %vm30, %v53
    %56 = vst.msk [vmem:[#allocation5 + $0x8] sm:$0xff] %vm30, %v54
    // Predicated region
    $region14: #{tpu_custom_call.1} parent=1 // pred_check
      _
    $region15: #{tpu_custom_call.1} parent=1 // pred_check_branch
      %58 = sbr.rel (0) target = $region17
    $region16: #{tpu_custom_call.1} parent=1 // pred_region
      %s60 = ssub.s32 256, 256
      %61 = vsyncadd [#allocation4], %s60
      %s62 = sshll.u32 [#allocation5], 4
      %s63 = int_to_ptr.vmem [resolvable:$true] %s62
      %68 = dma.vmem_to_hbm [thread:$0]  %s63, 256, %s2, [#allocation4], 128, 128, 8
    $region17: #{tpu_custom_call.1} parent=1 // pred_fallthru
      _
    // Predicated region
    $region18: #{tpu_custom_call.1} parent=1 // pred_check
      _
    $region19: #{tpu_custom_call.1} parent=1 // pred_check_branch
      %70 = sbr.rel (0) target = $region21
    $region20: #{tpu_custom_call.1} parent=1 // pred_region
      %71 = dma.done [#allocation4], 256
    $region21: #{tpu_custom_call.1} parent=1 // pred_fallthru
      _
    %72 = vsyncpa [#allocation3], 1
    %73 = vsyncpa [#allocation4], 1

</llo_original>
